<compile_context>
chip_gen: v7x
topology: tpu7x:2x2x1
jax: 0.10.0
libtpu: 0.0.40
codegen_flags: <defaults>
</compile_context>

<pallas_src>
import jax
import jax.numpy as jnp
from jax.experimental import pallas as pl
from jax.experimental.pallas import tpu as pltpu

NEG_SLOPE = 0.01  # PyTorch nn.LeakyReLU default negative_slope


def _leaky_relu(x):
    return jnp.where(x > 0, x, NEG_SLOPE * x)


def _cdiv(a, b):
    return -(-a // b)


def mlp_kernel(xT_ref,
               w1_ref, b1_ref,
               w2_ref, b2_ref,
               w3_ref, b3_ref,
               w4_ref, b4_ref,
               o_ref):
    """One batch-tile (lane tile) of the fused 4-layer MLP, transposed layout.

    xT_ref : (n_input,  TB)   compute dtype (bf16)
    wK_ref : (out_K, in_K)    compute dtype (bf16), PyTorch layout
    bK_ref : (out_K, 1)       f32 (broadcasts over the lane/batch axis)
    o_ref  : (n_output, TB)   f32
    """
    cdt = w1_ref.dtype  # bf16 matmul inputs; f32 accumulation + activations.

    h = jnp.dot(w1_ref[...], xT_ref[...],
                preferred_element_type=jnp.float32) + b1_ref[...]
    h = _leaky_relu(h)

    h = jnp.dot(w2_ref[...], h.astype(cdt),
                preferred_element_type=jnp.float32) + b2_ref[...]
    h = _leaky_relu(h)

    h = jnp.dot(w3_ref[...], h.astype(cdt),
                preferred_element_type=jnp.float32) + b3_ref[...]
    h = _leaky_relu(h)

    h = jnp.dot(w4_ref[...], h.astype(cdt),
                preferred_element_type=jnp.float32) + b4_ref[...]
    o_ref[...] = jnp.maximum(h, 0.0).astype(o_ref.dtype)


def net_hid3_1_forward(x, params, *, block_b=512, compute_dtype=jnp.bfloat16):
    """Forward pass.

    x      : (batch, n_input) f32
    params : dict with PyTorch-layout weights wK: (out_K, in_K) and biases bK: (out_K,)
    returns: (batch, n_output) f32
    """
    batch, n_input = x.shape
    n_output = params["w4"].shape[0]

    # Lane tile over the batch axis (multiple of 128); keep it small enough to be
    # a single step for small batches, capped at `block_b` for large ones.
    tb = max(128, min(block_b, 128 * _cdiv(batch, 128)))
    padded_b = _cdiv(batch, tb) * tb
    num_tiles = padded_b // tb

    # Transposed, lane-padded activations in the compute dtype.
    xT = jnp.pad(x.T.astype(compute_dtype), ((0, 0), (0, padded_b - batch)))

    ws = [params[f"w{i}"].astype(compute_dtype) for i in (1, 2, 3, 4)]
    bs = [params[f"b{i}"].astype(jnp.float32).reshape(-1, 1) for i in (1, 2, 3, 4)]

    def resident_spec(arr):
        nd = arr.ndim
        return pl.BlockSpec(arr.shape, lambda i, _nd=nd: (0,) * _nd)

    in_specs = [pl.BlockSpec((n_input, tb), lambda i: (0, i))]
    args = [xT]
    for w, b in zip(ws, bs):
        in_specs += [resident_spec(w), resident_spec(b)]
        args += [w, b]

    out_specs = pl.BlockSpec((n_output, tb), lambda i: (0, i))

    outT = pl.pallas_call(
        mlp_kernel,
        out_shape=jax.ShapeDtypeStruct((n_output, padded_b), jnp.float32),
        grid_spec=pl.GridSpec(
            grid=(num_tiles,),
            in_specs=in_specs,
            out_specs=out_specs,
        ),
        compiler_params=pltpu.CompilerParams(
            dimension_semantics=("parallel",),  # shard batch tiles across TCs on v7x
        ),
    )(*args)

    return outT[:, :batch].T


def init_params(key, n_input, n_hidden1, n_hidden2, n_hidden3, n_output):
    """Mimics PyTorch nn.Linear default init; weights stored as (out, in)."""
    dims = [(n_input, n_hidden1), (n_hidden1, n_hidden2),
            (n_hidden2, n_hidden3), (n_hidden3, n_output)]
    params = {}
    for i, (fan_in, fan_out) in enumerate(dims, start=1):
        key, kw, kb = jax.random.split(key, 3)
        bound = 1.0 / jnp.sqrt(jnp.asarray(fan_in, jnp.float32))
        params[f"w{i}"] = jax.random.uniform(kw, (fan_out, fan_in), jnp.float32,
                                             minval=-bound, maxval=bound)
        params[f"b{i}"] = jax.random.uniform(kb, (fan_out,), jnp.float32,
                                             minval=-bound, maxval=bound)
    return params


def reference_forward(x, params, compute_dtype=jnp.bfloat16):
    """Pure-JAX reference with matching precision (bf16 matmul inputs, f32 accumulation)."""
    h = x
    for i in range(1, 5):
        w = params[f"w{i}"]
        b = params[f"b{i}"]
        y = jnp.dot(h.astype(compute_dtype), w.T.astype(compute_dtype),
                    preferred_element_type=jnp.float32) + b.astype(jnp.float32)
        if i < 4:
            h = jnp.where(y > 0, y, NEG_SLOPE * y)
        else:
            h = jnp.maximum(y, 0.0)
    return h


if __name__ == "__main__":
    key = jax.random.PRNGKey(0)
    k_x, k_p = jax.random.split(key)

    batch = 8
    n_input, n_hidden1, n_hidden2, n_hidden3, n_output = 16, 32, 32, 16, 8

    x = jax.random.normal(k_x, (batch, n_input), jnp.float32)
    params = init_params(k_p, n_input, n_hidden1, n_hidden2, n_hidden3, n_output)

    out = net_hid3_1_forward(x, params)
    out = jax.block_until_ready(out)

    ref = reference_forward(x, params)
    assert out.shape == (batch, n_output)
    assert jnp.allclose(out, ref, atol=2e-2, rtol=2e-2), "mismatch vs JAX reference"

    print("KERNEL_OK")
</pallas_src>

<mosaic_0001>
module attributes {stable_mosaic.version = 11 : i64} {
  func.func @mlp_kernel(%arg0: i32, %arg1: memref<16x128xbf16, #tpu.memory_space<vmem>>, %arg2: memref<32x16xbf16, #tpu.memory_space<vmem>>, %arg3: memref<32x1xf32, #tpu.memory_space<vmem>>, %arg4: memref<32x32xbf16, #tpu.memory_space<vmem>>, %arg5: memref<32x1xf32, #tpu.memory_space<vmem>>, %arg6: memref<16x32xbf16, #tpu.memory_space<vmem>>, %arg7: memref<16x1xf32, #tpu.memory_space<vmem>>, %arg8: memref<8x16xbf16, #tpu.memory_space<vmem>>, %arg9: memref<8x1xf32, #tpu.memory_space<vmem>>, %arg10: memref<8x128xf32, #tpu.memory_space<vmem>>) attributes {dimension_semantics = [#tpu.dimension_semantics<parallel>], iteration_bounds = array<i64: 1>, scalar_prefetch = 0 : i64, scratch_operands = 0 : i64, tpu.core_type = #tpu.core_type<tc>, window_params = [{transform_indices = @transform_0, window_bounds = array<i64: 16, 128>}, {pipeline_mode = #tpu.pipeline_mode<synchronous>, transform_indices = @transform_1, window_bounds = array<i64: 32, 16>}, {pipeline_mode = #tpu.pipeline_mode<synchronous>, transform_indices = @transform_2, window_bounds = array<i64: 32, 1>}, {pipeline_mode = #tpu.pipeline_mode<synchronous>, transform_indices = @transform_3, window_bounds = array<i64: 32, 32>}, {pipeline_mode = #tpu.pipeline_mode<synchronous>, transform_indices = @transform_4, window_bounds = array<i64: 32, 1>}, {pipeline_mode = #tpu.pipeline_mode<synchronous>, transform_indices = @transform_5, window_bounds = array<i64: 16, 32>}, {pipeline_mode = #tpu.pipeline_mode<synchronous>, transform_indices = @transform_6, window_bounds = array<i64: 16, 1>}, {pipeline_mode = #tpu.pipeline_mode<synchronous>, transform_indices = @transform_7, window_bounds = array<i64: 8, 16>}, {pipeline_mode = #tpu.pipeline_mode<synchronous>, transform_indices = @transform_8, window_bounds = array<i64: 8, 1>}, {transform_indices = @transform_9, window_bounds = array<i64: 8, 128>}]} {
    %c0 = arith.constant 0 : index
    %c0_0 = arith.constant 0 : index
    %0 = vector.load %arg2[%c0, %c0_0] : memref<32x16xbf16, #tpu.memory_space<vmem>>, vector<32x16xbf16>
    %c0_1 = arith.constant 0 : index
    %c0_2 = arith.constant 0 : index
    %1 = vector.load %arg1[%c0_1, %c0_2] : memref<16x128xbf16, #tpu.memory_space<vmem>>, vector<16x128xbf16>
    %cst = arith.constant dense<0.000000e+00> : vector<32x128xf32>
    %2 = tpu.matmul %0, %1, %cst {dimension_numbers = #tpu.dot_dimension_numbers<[1], [0], [0], [1], [0, 0, 1, 1], [], []>} : vector<32x16xbf16>, vector<16x128xbf16>, vector<32x128xf32> -> vector<32x128xf32>
    %c0_3 = arith.constant 0 : index
    %c0_4 = arith.constant 0 : index
    %3 = vector.load %arg3[%c0_3, %c0_4] : memref<32x1xf32, #tpu.memory_space<vmem>>, vector<32x1xf32>
    %4 = vector.broadcast %3 : vector<32x1xf32> to vector<32x128xf32>
    %5 = arith.addf %2, %4 : vector<32x128xf32>
    %cst_5 = arith.constant 0.000000e+00 : f32
    %6 = vector.broadcast %cst_5 : f32 to vector<32x128xf32>
    %7 = arith.cmpf ogt, %5, %6 : vector<32x128xf32>
    %cst_6 = arith.constant 0.00999999977 : f32
    %8 = vector.broadcast %cst_6 : f32 to vector<32x128xf32>
    %9 = arith.mulf %8, %5 : vector<32x128xf32>
    %10 = arith.select %7, %5, %9 : vector<32x128xi1>, vector<32x128xf32>
    %c0_7 = arith.constant 0 : index
    %c0_8 = arith.constant 0 : index
    %11 = vector.load %arg4[%c0_7, %c0_8] : memref<32x32xbf16, #tpu.memory_space<vmem>>, vector<32x32xbf16>
    %12 = arith.truncf %10 : vector<32x128xf32> to vector<32x128xbf16>
    %cst_9 = arith.constant dense<0.000000e+00> : vector<32x128xf32>
    %13 = tpu.matmul %11, %12, %cst_9 {dimension_numbers = #tpu.dot_dimension_numbers<[1], [0], [0], [1], [0, 0, 1, 1], [], []>} : vector<32x32xbf16>, vector<32x128xbf16>, vector<32x128xf32> -> vector<32x128xf32>
    %c0_10 = arith.constant 0 : index
    %c0_11 = arith.constant 0 : index
    %14 = vector.load %arg5[%c0_10, %c0_11] : memref<32x1xf32, #tpu.memory_space<vmem>>, vector<32x1xf32>
    %15 = vector.broadcast %14 : vector<32x1xf32> to vector<32x128xf32>
    %16 = arith.addf %13, %15 : vector<32x128xf32>
    %cst_12 = arith.constant 0.000000e+00 : f32
    %17 = vector.broadcast %cst_12 : f32 to vector<32x128xf32>
    %18 = arith.cmpf ogt, %16, %17 : vector<32x128xf32>
    %cst_13 = arith.constant 0.00999999977 : f32
    %19 = vector.broadcast %cst_13 : f32 to vector<32x128xf32>
    %20 = arith.mulf %19, %16 : vector<32x128xf32>
    %21 = arith.select %18, %16, %20 : vector<32x128xi1>, vector<32x128xf32>
    %c0_14 = arith.constant 0 : index
    %c0_15 = arith.constant 0 : index
    %22 = vector.load %arg6[%c0_14, %c0_15] : memref<16x32xbf16, #tpu.memory_space<vmem>>, vector<16x32xbf16>
    %23 = arith.truncf %21 : vector<32x128xf32> to vector<32x128xbf16>
    %cst_16 = arith.constant dense<0.000000e+00> : vector<16x128xf32>
    %24 = tpu.matmul %22, %23, %cst_16 {dimension_numbers = #tpu.dot_dimension_numbers<[1], [0], [0], [1], [0, 0, 1, 1], [], []>} : vector<16x32xbf16>, vector<32x128xbf16>, vector<16x128xf32> -> vector<16x128xf32>
    %c0_17 = arith.constant 0 : index
    %c0_18 = arith.constant 0 : index
    %25 = vector.load %arg7[%c0_17, %c0_18] : memref<16x1xf32, #tpu.memory_space<vmem>>, vector<16x1xf32>
    %26 = vector.broadcast %25 : vector<16x1xf32> to vector<16x128xf32>
    %27 = arith.addf %24, %26 : vector<16x128xf32>
    %cst_19 = arith.constant 0.000000e+00 : f32
    %28 = vector.broadcast %cst_19 : f32 to vector<16x128xf32>
    %29 = arith.cmpf ogt, %27, %28 : vector<16x128xf32>
    %cst_20 = arith.constant 0.00999999977 : f32
    %30 = vector.broadcast %cst_20 : f32 to vector<16x128xf32>
    %31 = arith.mulf %30, %27 : vector<16x128xf32>
    %32 = arith.select %29, %27, %31 : vector<16x128xi1>, vector<16x128xf32>
    %c0_21 = arith.constant 0 : index
    %c0_22 = arith.constant 0 : index
    %33 = vector.load %arg8[%c0_21, %c0_22] : memref<8x16xbf16, #tpu.memory_space<vmem>>, vector<8x16xbf16>
    %34 = arith.truncf %32 : vector<16x128xf32> to vector<16x128xbf16>
    %cst_23 = arith.constant dense<0.000000e+00> : vector<8x128xf32>
    %35 = tpu.matmul %33, %34, %cst_23 {dimension_numbers = #tpu.dot_dimension_numbers<[1], [0], [0], [1], [0, 0, 1, 1], [], []>} : vector<8x16xbf16>, vector<16x128xbf16>, vector<8x128xf32> -> vector<8x128xf32>
    %c0_24 = arith.constant 0 : index
    %c0_25 = arith.constant 0 : index
    %36 = vector.load %arg9[%c0_24, %c0_25] : memref<8x1xf32, #tpu.memory_space<vmem>>, vector<8x1xf32>
    %37 = vector.broadcast %36 : vector<8x1xf32> to vector<8x128xf32>
    %38 = arith.addf %35, %37 : vector<8x128xf32>
    %cst_26 = arith.constant 0.000000e+00 : f32
    %39 = vector.broadcast %cst_26 : f32 to vector<8x128xf32>
    %40 = arith.maximumf %38, %39 : vector<8x128xf32>
    %c0_27 = arith.constant 0 : index
    %c0_28 = arith.constant 0 : index
    %41 = vector.load %arg10[%c0_27, %c0_28] : memref<8x128xf32, #tpu.memory_space<vmem>>, vector<8x128xf32>
    tpu.vector_store %arg10[%c0_27, %c0_28], %40 {strides = array<i32>} : memref<8x128xf32, #tpu.memory_space<vmem>>, vector<8x128xf32>,
    return
  }
  func.func @transform_0(%arg0: i32) -> (i32, i32) {
    %c0_i32 = arith.constant 0 : i32
    %c0_i32_0 = arith.constant 0 : i32
    return %c0_i32, %arg0 : i32, i32
  }
  func.func @transform_1(%arg0: i32) -> (i32, i32) {
    %c0_i32 = arith.constant 0 : i32
    %c0_i32_0 = arith.constant 0 : i32
    %c0_i32_1 = arith.constant 0 : i32
    return %c0_i32, %c0_i32_0 : i32, i32
  }
  func.func @transform_2(%arg0: i32) -> (i32, i32) {
    %c0_i32 = arith.constant 0 : i32
    %c0_i32_0 = arith.constant 0 : i32
    %c0_i32_1 = arith.constant 0 : i32
    return %c0_i32, %c0_i32_0 : i32, i32
  }
  func.func @transform_3(%arg0: i32) -> (i32, i32) {
    %c0_i32 = arith.constant 0 : i32
    %c0_i32_0 = arith.constant 0 : i32
    %c0_i32_1 = arith.constant 0 : i32
    return %c0_i32, %c0_i32_0 : i32, i32
  }
  func.func @transform_4(%arg0: i32) -> (i32, i32) {
    %c0_i32 = arith.constant 0 : i32
    %c0_i32_0 = arith.constant 0 : i32
    %c0_i32_1 = arith.constant 0 : i32
    return %c0_i32, %c0_i32_0 : i32, i32
  }
  func.func @transform_5(%arg0: i32) -> (i32, i32) {
    %c0_i32 = arith.constant 0 : i32
    %c0_i32_0 = arith.constant 0 : i32
    %c0_i32_1 = arith.constant 0 : i32
    return %c0_i32, %c0_i32_0 : i32, i32
  }
  func.func @transform_6(%arg0: i32) -> (i32, i32) {
    %c0_i32 = arith.constant 0 : i32
    %c0_i32_0 = arith.constant 0 : i32
    %c0_i32_1 = arith.constant 0 : i32
    return %c0_i32, %c0_i32_0 : i32, i32
  }
  func.func @transform_7(%arg0: i32) -> (i32, i32) {
    %c0_i32 = arith.constant 0 : i32
    %c0_i32_0 = arith.constant 0 : i32
    %c0_i32_1 = arith.constant 0 : i32
    return %c0_i32, %c0_i32_0 : i32, i32
  }
  func.func @transform_8(%arg0: i32) -> (i32, i32) {
    %c0_i32 = arith.constant 0 : i32
    %c0_i32_0 = arith.constant 0 : i32
    %c0_i32_1 = arith.constant 0 : i32
    return %c0_i32, %c0_i32_0 : i32, i32
  }
  func.func @transform_9(%arg0: i32) -> (i32, i32) {
    %c0_i32 = arith.constant 0 : i32
    %c0_i32_0 = arith.constant 0 : i32
    return %c0_i32, %arg0 : i32, i32
  }
}

</mosaic_0001>

<llo_original>
// kernel: tpu_custom_call.1
$region0: #{tpu_custom_call.1}
  #allocation0 [shape = 'u32[]', space=smem, size = 0x4, offset = 0x4, fixed_abs, tag = 'smem constant byte address 0x4 - core index']
  #allocation1 [shape = 'u32[144,128]{1,0:T(1,128)}', space=vmem, size = 0x12000, scoped, tag = 'internal scratch']
  %s0 = inlined_call_operand.vmem [shape: bf16[16,128], index: 0, kind: input, shape index: {}]
  %s1 = inlined_call_operand.vmem [shape: bf16[32,16], index: 1, kind: input, shape index: {}]
  %s2 = inlined_call_operand.vmem [shape: f32[32,1], index: 2, kind: input, shape index: {}]
  %s3 = inlined_call_operand.vmem [shape: bf16[32,32], index: 3, kind: input, shape index: {}]
  %s4 = inlined_call_operand.vmem [shape: f32[32,1], index: 4, kind: input, shape index: {}]
  %s5 = inlined_call_operand.vmem [shape: bf16[16,32], index: 5, kind: input, shape index: {}]
  %s6 = inlined_call_operand.vmem [shape: f32[16,1], index: 6, kind: input, shape index: {}]
  %s7 = inlined_call_operand.vmem [shape: bf16[8,16], index: 7, kind: input, shape index: {}]
  %s8 = inlined_call_operand.vmem [shape: f32[8,1], index: 8, kind: input, shape index: {}]
  %s9 = inlined_call_operand.hbm [shape: f32[8,128], index: 9, kind: output, shape index: {}]
  %s10 = sld [smem:[#allocation0]]
  $region46: #{tpu_custom_call.1} parent=0
    _
  %s12 = ssub.s32 1, %s10
  %s13 = scalar_select 0, %s12, %s10
  $region1: #{tpu_custom_call.1} parent=0
    #allocation2 [shape = 'u8[4096]{0}', space=vmem, size = 0x1000, scoped, tag = 'output window, operand 0, single buffered']
    #allocation3 [shape = 's32[1]{0}', space=sflag, size = 0x4, scoped, tag = 'scoped memory for tpu_custom_call.1']
    %14 = vsyncpa [#allocation3], 0
    // Predicated region
    $region2: #{tpu_custom_call.1} parent=1 // pred_check
      _
    $region3: #{tpu_custom_call.1} parent=1 // pred_check_branch
      %16 = sbr.rel (0) target = $region5
    $region4: #{tpu_custom_call.1} parent=1 // pred_region
      _
    $region5: #{tpu_custom_call.1} parent=1 // pred_fallthru
      _
    // Predicated region
    $region6: #{tpu_custom_call.1} parent=1 // pred_check
      _
    $region7: #{tpu_custom_call.1} parent=1 // pred_check_branch
      %18 = sbr.rel (0) target = $region9
    $region8: #{tpu_custom_call.1} parent=1 // pred_region
      _
    $region9: #{tpu_custom_call.1} parent=1 // pred_fallthru
      _
    // Predicated region
    $region10: #{tpu_custom_call.1} parent=1 // pred_check
      _
    $region11: #{tpu_custom_call.1} parent=1 // pred_check_branch
      %20 = sbr.rel (0) target = $region13
    $region12: #{tpu_custom_call.1} parent=1 // pred_region
      _
    $region13: #{tpu_custom_call.1} parent=1 // pred_fallthru
      _
    // Predicated region
    $region14: #{tpu_custom_call.1} parent=1 // pred_check
      _
    $region15: #{tpu_custom_call.1} parent=1 // pred_check_branch
      %22 = sbr.rel (0) target = $region17
    $region16: #{tpu_custom_call.1} parent=1 // pred_region
      _
    $region17: #{tpu_custom_call.1} parent=1 // pred_fallthru
      _
    // Predicated region
    $region18: #{tpu_custom_call.1} parent=1 // pred_check
      _
    $region19: #{tpu_custom_call.1} parent=1 // pred_check_branch
      %24 = sbr.rel (0) target = $region21
    $region20: #{tpu_custom_call.1} parent=1 // pred_region
      _
    $region21: #{tpu_custom_call.1} parent=1 // pred_fallthru
      _
    // Predicated region
    $region22: #{tpu_custom_call.1} parent=1 // pred_check
      _
    $region23: #{tpu_custom_call.1} parent=1 // pred_check_branch
      %26 = sbr.rel (0) target = $region25
    $region24: #{tpu_custom_call.1} parent=1 // pred_region
      _
    $region25: #{tpu_custom_call.1} parent=1 // pred_fallthru
      _
    // Predicated region
    $region26: #{tpu_custom_call.1} parent=1 // pred_check
      _
    $region27: #{tpu_custom_call.1} parent=1 // pred_check_branch
      %28 = sbr.rel (0) target = $region29
    $region28: #{tpu_custom_call.1} parent=1 // pred_region
      _
    $region29: #{tpu_custom_call.1} parent=1 // pred_fallthru
      _
    // Predicated region
    $region30: #{tpu_custom_call.1} parent=1 // pred_check
      _
    $region31: #{tpu_custom_call.1} parent=1 // pred_check_branch
      %30 = sbr.rel (0) target = $region33
    $region32: #{tpu_custom_call.1} parent=1 // pred_region
      _
    $region33: #{tpu_custom_call.1} parent=1 // pred_fallthru
      _
    // Predicated region
    $region34: #{tpu_custom_call.1} parent=1 // pred_check
      _
    $region35: #{tpu_custom_call.1} parent=1 // pred_check_branch
      %32 = sbr.rel (0) target = $region37
    $region36: #{tpu_custom_call.1} parent=1 // pred_region
      _
    $region37: #{tpu_custom_call.1} parent=1 // pred_fallthru
      _
    %v34 = vld [vmem:[%s1] sm:$0xf]
    %v35 = vld [vmem:[%s1 + $0x4] sm:$0xf]
    %v36 = vld [vmem:[%s1 + $0x8] sm:$0xf]
    %v37 = vld [vmem:[%s1 + $0xc] sm:$0xf]
    %v38 = vld [vmem:[%s0] sm:$0xf]
    %v39 = vld [vmem:[%s0 + $0x4] sm:$0xf]
    %v40 = vld [vmem:[%s2] sm:$0xff]
    %v41 = vld [vmem:[%s2 + $0x8] sm:$0xff]
    %v42 = vld [vmem:[%s2 + $0x10] sm:$0xff]
    %v43 = vld [vmem:[%s2 + $0x18] sm:$0xff]
    %45 = vset.pattern.permute.xlu0 0
    %46 = vperm.xlu0 %45, %v40
    %v47 = vpop.permute.xlu0 %46
    %50 = vset.pattern.permute.xlu0 0
    %51 = vperm.xlu0 %50, %v41
    %v52 = vpop.permute.xlu0 %51
    %55 = vset.pattern.permute.xlu0 0
    %56 = vperm.xlu0 %55, %v42
    %v57 = vpop.permute.xlu0 %56
    %60 = vset.pattern.permute.xlu0 0
    %61 = vperm.xlu0 %60, %v43
    %v62 = vpop.permute.xlu0 %61
    %v68 = vunpack.c.l.b16 %v34
    %v69 = vunpack.c.l.b16 %v35
    %v70 = vunpack.c.l.b16 %v36
    %v71 = vunpack.c.l.b16 %v37
    %v72 = vpack.c.b16 %v69, %v68
    %v73 = vpack.c.b16 %v71, %v70
    %v76 = vunpack.c.l.b16 %v38
    %v77 = vunpack.c.l.b16 %v39
    %v78 = vpack.c.b16 %v77, %v76
    %vm80 = vcmask 130048
    %v82 = vsel %vm80, %v72, 0
    %v85 = vsel %vm80, %v73, 0
    %87 = vmatprep.subr.bf16.mxu0 0
    %88 = vmatpush1.bf16.msra.mxu0 %v78
    %89 = vmatprep.subr.bf16.mxu0 0
    %90 = vmatpush1.bf16.msra.mxu0 0
    %91 = vmatprep.subr.bf16.mxu0 0
    %92 = vmatpush1.bf16.msra.mxu0 0
    %93 = vmatprep.subr.bf16.mxu0 0
    %94 = vmatpush1.bf16.msra.mxu0 0
    %95 = vmatprep.subr.bf16.mxu0 0
    %96 = vmatpush1.bf16.msra.mxu0 0
    %97 = vmatprep.subr.bf16.mxu0 0
    %98 = vmatpush1.bf16.msra.mxu0 0
    %99 = vmatprep.subr.bf16.mxu0 0
    %100 = vmatpush1.bf16.msra.mxu0 0
    %101 = vmatprep.subr.bf16.mxu0 0
    %102 = vmatpush1.bf16.msra.mxu0 0
    %103 = vmatprep.subr.bf16.mxu0 0
    %104 = vmatpush1.bf16.msra.mxu0 0
    %105 = vmatprep.subr.bf16.mxu0 0
    %106 = vmatpush1.bf16.msra.mxu0 0
    %107 = vmatprep.subr.bf16.mxu0 0
    %108 = vmatpush1.bf16.msra.mxu0 0
    %109 = vmatprep.subr.bf16.mxu0 0
    %110 = vmatpush1.bf16.msra.mxu0 0
    %111 = vmatprep.subr.bf16.mxu0 0
    %112 = vmatpush1.bf16.msra.mxu0 0
    %113 = vmatprep.subr.bf16.mxu0 0
    %114 = vmatpush1.bf16.msra.mxu0 0
    %115 = vmatprep.subr.bf16.mxu0 0
    %116 = vmatpush1.bf16.msra.mxu0 0
    %117 = vmatprep.subr.bf16.mxu0 0
    %118 = vmatpush1.bf16.msra.mxu0 0
    %119 = vmatprep.mubr.bf16.mxu0 0
    %120 = vmatmul.mubr.bf16.gmra.mrb[0].mxu0 %v82
    %v121 = vpop.f32.mrb[0].mxu0
    %v122 = vadd.f32 %v47, %v121
    %v123 = vpop.f32.mrb[0].mxu0
    %v124 = vpop.f32.mrb[0].mxu0
    %v125 = vadd.f32 %v52, %v124
    %v126 = vpop.f32.mrb[0].mxu0
    %127 = vmatprep.mubr.bf16.mxu0 0
    %128 = vmatmul.mubr.bf16.gmra.mrb[0].mxu0 %v85
    %v129 = vpop.f32.mrb[0].mxu0
    %v130 = vadd.f32 %v57, %v129
    %v131 = vpop.f32.mrb[0].mxu0
    %v132 = vpop.f32.mrb[0].mxu0
    %v133 = vadd.f32 %v62, %v132
    %v134 = vpop.f32.mrb[0].mxu0
    %135 = vdwg.mxu0
    %vm136 = vcmp.gt.f32.partialorder %v122, 0.0
    %vm137 = vcmp.gt.f32.partialorder %v125, 0.0
    %vm138 = vcmp.gt.f32.partialorder %v130, 0.0
    %vm139 = vcmp.gt.f32.partialorder %v133, 0.0
    %v140 = vmul.f32 %v122, 0.01
    %v141 = vmul.f32 %v125, 0.01
    %v142 = vmul.f32 %v130, 0.01
    %v143 = vmul.f32 %v133, 0.01
    %v144 = vsel %vm136, %v122, %v140
    %v145 = vsel %vm137, %v125, %v141
    %v146 = vsel %vm138, %v130, %v142
    %v147 = vsel %vm139, %v133, %v143
    %v148 = vld [vmem:[%s3] sm:$0xf]
    %v149 = vld [vmem:[%s3 + $0x4] sm:$0xf]
    %v150 = vld [vmem:[%s3 + $0x8] sm:$0xf]
    %v151 = vld [vmem:[%s3 + $0xc] sm:$0xf]
    %v152 = vpack.c.bf16 %v145, %v144
    %v153 = vpack.c.bf16 %v147, %v146
    %v154 = vld [vmem:[%s4] sm:$0xff]
    %v155 = vld [vmem:[%s4 + $0x8] sm:$0xff]
    %v156 = vld [vmem:[%s4 + $0x10] sm:$0xff]
    %v157 = vld [vmem:[%s4 + $0x18] sm:$0xff]
    %159 = vset.pattern.permute.xlu0 0
    %160 = vperm.xlu0 %159, %v154
    %v161 = vpop.permute.xlu0 %160
    %164 = vset.pattern.permute.xlu0 0
    %165 = vperm.xlu0 %164, %v155
    %v166 = vpop.permute.xlu0 %165
    %169 = vset.pattern.permute.xlu0 0
    %170 = vperm.xlu0 %169, %v156
    %v171 = vpop.permute.xlu0 %170
    %174 = vset.pattern.permute.xlu0 0
    %175 = vperm.xlu0 %174, %v157
    %v176 = vpop.permute.xlu0 %175
    %v182 = vunpack.c.l.b16 %v148
    %v183 = vunpack.c.l.b16 %v149
    %v184 = vunpack.c.l.b16 %v150
    %v185 = vunpack.c.l.b16 %v151
    %v186 = vpack.c.b16 %v183, %v182
    %v187 = vpack.c.b16 %v185, %v184
    %vm188 = vcmask 261120
    %v190 = vsel %vm188, %v186, 0
    %v193 = vsel %vm188, %v187, 0
    %195 = vmatprep.subr.bf16.mxu0 0
    %196 = vmatpush1.bf16.msra.mxu0 %v152
    %197 = vmatprep.subr.bf16.mxu0 0
    %198 = vmatpush1.bf16.msra.mxu0 %v153
    %199 = vmatprep.subr.bf16.mxu0 0
    %200 = vmatpush1.bf16.msra.mxu0 0
    %201 = vmatprep.subr.bf16.mxu0 0
    %202 = vmatpush1.bf16.msra.mxu0 0
    %203 = vmatprep.subr.bf16.mxu0 0
    %204 = vmatpush1.bf16.msra.mxu0 0
    %205 = vmatprep.subr.bf16.mxu0 0
    %206 = vmatpush1.bf16.msra.mxu0 0
    %207 = vmatprep.subr.bf16.mxu0 0
    %208 = vmatpush1.bf16.msra.mxu0 0
    %209 = vmatprep.subr.bf16.mxu0 0
    %210 = vmatpush1.bf16.msra.mxu0 0
    %211 = vmatprep.subr.bf16.mxu0 0
    %212 = vmatpush1.bf16.msra.mxu0 0
    %213 = vmatprep.subr.bf16.mxu0 0
    %214 = vmatpush1.bf16.msra.mxu0 0
    %215 = vmatprep.subr.bf16.mxu0 0
    %216 = vmatpush1.bf16.msra.mxu0 0
    %217 = vmatprep.subr.bf16.mxu0 0
    %218 = vmatpush1.bf16.msra.mxu0 0
    %219 = vmatprep.subr.bf16.mxu0 0
    %220 = vmatpush1.bf16.msra.mxu0 0
    %221 = vmatprep.subr.bf16.mxu0 0
    %222 = vmatpush1.bf16.msra.mxu0 0
    %223 = vmatprep.subr.bf16.mxu0 0
    %224 = vmatpush1.bf16.msra.mxu0 0
    %225 = vmatprep.subr.bf16.mxu0 0
    %226 = vmatpush1.bf16.msra.mxu0 0
    %227 = vmatprep.mubr.bf16.mxu0 0
    %228 = vmatmul.mubr.bf16.gmra.mrb[0].mxu0 %v190
    %v229 = vpop.f32.mrb[0].mxu0
    %v230 = vadd.f32 %v161, %v229
    %v231 = vpop.f32.mrb[0].mxu0
    %v232 = vpop.f32.mrb[0].mxu0
    %v233 = vadd.f32 %v166, %v232
    %v234 = vpop.f32.mrb[0].mxu0
    %235 = vmatprep.mubr.bf16.mxu0 0
    %236 = vmatmul.mubr.bf16.gmra.mrb[0].mxu0 %v193
    %v237 = vpop.f32.mrb[0].mxu0
    %v238 = vadd.f32 %v171, %v237
    %v239 = vpop.f32.mrb[0].mxu0
    %v240 = vpop.f32.mrb[0].mxu0
    %v241 = vadd.f32 %v176, %v240
    %v242 = vpop.f32.mrb[0].mxu0
    %243 = vdwg.mxu0
    %vm244 = vcmp.gt.f32.partialorder %v230, 0.0
    %vm245 = vcmp.gt.f32.partialorder %v233, 0.0
    %vm246 = vcmp.gt.f32.partialorder %v238, 0.0
    %vm247 = vcmp.gt.f32.partialorder %v241, 0.0
    %v248 = vmul.f32 %v230, 0.01
    %v249 = vmul.f32 %v233, 0.01
    %v250 = vmul.f32 %v238, 0.01
    %v251 = vmul.f32 %v241, 0.01
    %v252 = vsel %vm244, %v230, %v248
    %v253 = vsel %vm245, %v233, %v249
    %v254 = vsel %vm246, %v238, %v250
    %v255 = vsel %vm247, %v241, %v251
    %v256 = vld [vmem:[%s5] sm:$0xf]
    %v257 = vld [vmem:[%s5 + $0x4] sm:$0xf]
    %v258 = vpack.c.bf16 %v253, %v252
    %v259 = vpack.c.bf16 %v255, %v254
    %v260 = vld [vmem:[%s6] sm:$0xff]
    %v261 = vld [vmem:[%s6 + $0x8] sm:$0xff]
    %263 = vset.pattern.permute.xlu0 0
    %264 = vperm.xlu0 %263, %v260
    %v265 = vpop.permute.xlu0 %264
    %268 = vset.pattern.permute.xlu0 0
    %269 = vperm.xlu0 %268, %v261
    %v270 = vpop.permute.xlu0 %269
    %v274 = vunpack.c.l.b16 %v256
    %v275 = vunpack.c.l.b16 %v257
    %v276 = vpack.c.b16 %v275, %v274
    %v278 = vsel %vm188, %v276, 0
    %280 = vmatprep.subr.bf16.mxu0 0
    %281 = vmatpush1.bf16.msra.mxu0 %v258
    %282 = vmatprep.subr.bf16.mxu0 0
    %283 = vmatpush1.bf16.msra.mxu0 %v259
    %284 = vmatprep.subr.bf16.mxu0 0
    %285 = vmatpush1.bf16.msra.mxu0 0
    %286 = vmatprep.subr.bf16.mxu0 0
    %287 = vmatpush1.bf16.msra.mxu0 0
    %288 = vmatprep.subr.bf16.mxu0 0
    %289 = vmatpush1.bf16.msra.mxu0 0
    %290 = vmatprep.subr.bf16.mxu0 0
    %291 = vmatpush1.bf16.msra.mxu0 0
    %292 = vmatprep.subr.bf16.mxu0 0
    %293 = vmatpush1.bf16.msra.mxu0 0
    %294 = vmatprep.subr.bf16.mxu0 0
    %295 = vmatpush1.bf16.msra.mxu0 0
    %296 = vmatprep.subr.bf16.mxu0 0
    %297 = vmatpush1.bf16.msra.mxu0 0
    %298 = vmatprep.subr.bf16.mxu0 0
    %299 = vmatpush1.bf16.msra.mxu0 0
    %300 = vmatprep.subr.bf16.mxu0 0
    %301 = vmatpush1.bf16.msra.mxu0 0
    %302 = vmatprep.subr.bf16.mxu0 0
    %303 = vmatpush1.bf16.msra.mxu0 0
    %304 = vmatprep.subr.bf16.mxu0 0
    %305 = vmatpush1.bf16.msra.mxu0 0
    %306 = vmatprep.subr.bf16.mxu0 0
    %307 = vmatpush1.bf16.msra.mxu0 0
    %308 = vmatprep.subr.bf16.mxu0 0
    %309 = vmatpush1.bf16.msra.mxu0 0
    %310 = vmatprep.subr.bf16.mxu0 0
    %311 = vmatpush1.bf16.msra.mxu0 0
    %312 = vmatprep.mubr.bf16.mxu0 0
    %313 = vmatmul.mubr.bf16.gmra.mrb[0].mxu0 %v278
    %v314 = vpop.f32.mrb[0].mxu0
    %v315 = vadd.f32 %v265, %v314
    %v316 = vpop.f32.mrb[0].mxu0
    %v317 = vpop.f32.mrb[0].mxu0
    %v318 = vadd.f32 %v270, %v317
    %v319 = vpop.f32.mrb[0].mxu0
    %320 = vdwg.mxu0
    %vm321 = vcmp.gt.f32.partialorder %v315, 0.0
    %vm322 = vcmp.gt.f32.partialorder %v318, 0.0
    %v323 = vmul.f32 %v315, 0.01
    %v324 = vmul.f32 %v318, 0.01
    %v325 = vsel %vm321, %v315, %v323
    %v326 = vsel %vm322, %v318, %v324
    %v327 = vld [vmem:[%s7] sm:$0xf]
    %v328 = vpack.c.bf16 %v326, %v325
    %v329 = vld [vmem:[%s8] sm:$0xff]
    %331 = vset.pattern.permute.xlu0 0
    %332 = vperm.xlu0 %331, %v329
    %v333 = vpop.permute.xlu0 %332
    %v336 = vsel %vm80, %v327, 0
    %338 = vmatprep.subr.bf16.mxu0 0
    %339 = vmatpush1.bf16.msra.mxu0 %v328
    %340 = vmatprep.subr.bf16.mxu0 0
    %341 = vmatpush1.bf16.msra.mxu0 0
    %342 = vmatprep.subr.bf16.mxu0 0
    %343 = vmatpush1.bf16.msra.mxu0 0
    %344 = vmatprep.subr.bf16.mxu0 0
    %345 = vmatpush1.bf16.msra.mxu0 0
    %346 = vmatprep.subr.bf16.mxu0 0
    %347 = vmatpush1.bf16.msra.mxu0 0
    %348 = vmatprep.subr.bf16.mxu0 0
    %349 = vmatpush1.bf16.msra.mxu0 0
    %350 = vmatprep.subr.bf16.mxu0 0
    %351 = vmatpush1.bf16.msra.mxu0 0
    %352 = vmatprep.subr.bf16.mxu0 0
    %353 = vmatpush1.bf16.msra.mxu0 0
    %354 = vmatprep.subr.bf16.mxu0 0
    %355 = vmatpush1.bf16.msra.mxu0 0
    %356 = vmatprep.subr.bf16.mxu0 0
    %357 = vmatpush1.bf16.msra.mxu0 0
    %358 = vmatprep.subr.bf16.mxu0 0
    %359 = vmatpush1.bf16.msra.mxu0 0
    %360 = vmatprep.subr.bf16.mxu0 0
    %361 = vmatpush1.bf16.msra.mxu0 0
    %362 = vmatprep.subr.bf16.mxu0 0
    %363 = vmatpush1.bf16.msra.mxu0 0
    %364 = vmatprep.subr.bf16.mxu0 0
    %365 = vmatpush1.bf16.msra.mxu0 0
    %366 = vmatprep.subr.bf16.mxu0 0
    %367 = vmatpush1.bf16.msra.mxu0 0
    %368 = vmatprep.subr.bf16.mxu0 0
    %369 = vmatpush1.bf16.msra.mxu0 0
    %370 = vmatprep.mubr.bf16.mxu0 0
    %371 = vmatmul.mubr.bf16.gmra.mrb[0].mxu0 %v336
    %v372 = vpop.f32.mrb[0].mxu0
    %v373 = vadd.f32 %v333, %v372
    %v374 = vpop.f32.mrb[0].mxu0
    %v375 = vpop.f32.mrb[0].mxu0
    %v376 = vpop.f32.mrb[0].mxu0
    %377 = vdwg.mxu0
    %v378 = vmax.f32 %v373, 0.0
    %379 = vst [vmem:[#allocation2] sm:$0xff] %v378
    // Predicated region
    $region38: #{tpu_custom_call.1} parent=1 // pred_check
      _
    $region39: #{tpu_custom_call.1} parent=1 // pred_check_branch
      %381 = sbr.rel (0) target = $region41
    $region40: #{tpu_custom_call.1} parent=1 // pred_region
      %s383 = ssub.s32 128, 128
      %384 = vsyncadd [#allocation3], %s383
      %s386 = sshll.u32 [#allocation2], 4
      %s387 = int_to_ptr.vmem [resolvable:$true] %s386
      %389 = dma.vmem_to_hbm [thread:$0]  %s387, 128, %s9, [#allocation3]
    $region41: #{tpu_custom_call.1} parent=1 // pred_fallthru
      _
    // Predicated region
    $region42: #{tpu_custom_call.1} parent=1 // pred_check
      _
    $region43: #{tpu_custom_call.1} parent=1 // pred_check_branch
      %391 = sbr.rel (0) target = $region45
    $region44: #{tpu_custom_call.1} parent=1 // pred_region
      %392 = dma.done [#allocation3], 128
    $region45: #{tpu_custom_call.1} parent=1 // pred_fallthru
      _
    %393 = vsyncpa [#allocation3], 1

</llo_original>
